<compile_context>
chip_gen: v7x
topology: tpu7x:2x2x1
jax: 0.10.0
libtpu: 0.0.40
codegen_flags: <defaults>
</compile_context>

<pallas_src>
import functools
import math

import jax
import jax.numpy as jnp
from jax.experimental import pallas as pl
from jax.experimental.pallas import tpu as pltpu


def _round_up(x: int, m: int) -> int:
    return ((x + m - 1) // m) * m


def collapse_ensemble(weights, biases):
    """Collapse M linear heads into one averaged head (exact for linear members).

    Returns:
      w_avg_t: [n_classes, D] averaged weights, lane-dense along D.
      b_avg:   [1, n_classes] averaged bias, float32.
    Hoist/cache this when the ensemble weights are static across calls.
    """
    _, _, n_classes = weights.shape
    w_avg = jnp.mean(weights.astype(jnp.float32), axis=0).astype(weights.dtype)
    w_avg_t = jnp.transpose(w_avg, (1, 0))                     # [n_classes, D]
    b_avg = jnp.mean(biases.astype(jnp.float32), axis=0).reshape(1, n_classes)
    return w_avg_t, b_avg


def _ensemble_kernel(x_ref, wt_ref, b_ref, o_ref, acc_ref, *, n_classes, k_rem):
    """Grid = (batch tiles, K tiles). K (reduction) axis is last / 'arbitrary'."""
    k = pl.program_id(1)
    last_k = pl.num_programs(1) - 1

    @pl.when(k == 0)
    def _():
        # Bias folded into the accumulator init (no epilogue add, one less add).
        acc_ref[...] = jnp.broadcast_to(b_ref[...], acc_ref.shape)

    x = x_ref[...]
    if k_rem:
        # D is not a multiple of tk: the last K tile reads past the array end
        # (unspecified values).  Zero those columns before the dot; W is also
        # zero-padded there, so the padded contribution is exactly 0.
        col = jax.lax.broadcasted_iota(jnp.int32, x.shape, 1)
        valid = jnp.logical_or(k != last_k, col < k_rem)
        x = jnp.where(valid, x, jnp.zeros_like(x))

    # Contract x [tb, tk] against W^T [n_classes, tk] over the last dims.
    # Operands keep their input dtype (bf16 stays bf16 into the MXU);
    # accumulation is f32 via preferred_element_type.
    acc_ref[...] += jax.lax.dot_general(
        x, wt_ref[...],
        dimension_numbers=(((1,), (1,)), ((), ())),
        preferred_element_type=jnp.float32)

    @pl.when(k == last_k)
    def _():
        logits = acc_ref[...]                              # [tb, n_classes], f32
        if n_classes == 1:
            probs = 1.0 / (1.0 + jnp.exp(-logits))         # torch.sigmoid
        else:
            mx = jnp.max(logits, axis=1, keepdims=True)    # torch.softmax(dim=1)
            e = jnp.exp(logits - mx)
            probs = e / jnp.sum(e, axis=1, keepdims=True)  # exact division
        o_ref[...] = probs.astype(o_ref.dtype)


def averaging_ensemble(x_nchw, weights, biases, *, batch_tile=256, k_tile=2048):
    """
    Args:
      x_nchw:  [B, C, H, W] input (f32 or bf16).
      weights: [M, D, n_classes] stacked per-network linear weights, D = C*H*W.
      biases:  [M, 1, n_classes] stacked per-network biases.
    Returns:
      [B, n_classes] float32 probabilities (sigmoid if n_classes == 1,
      softmax over axis 1 otherwise) — matching AveragingEnsemble.forward.
    """
    B = x_nchw.shape[0]
    D = math.prod(x_nchw.shape[1:])
    M, Dw, n_classes = weights.shape
    assert Dw == D, f"weight feature dim {Dw} != flattened input dim {D}"

    # Flatten NCHW -> [B, D] (row-major, matches torch .view); metadata-only.
    x2d = x_nchw.reshape(B, D)

    # Algebraic collapse of the linear ensemble (exact for linear members).
    w_avg_t, b_avg = collapse_ensemble(weights, biases)

    # ---- tile sizes -------------------------------------------------------
    tb = _round_up(max(8, min(batch_tile, _round_up(B, 8))), 8)
    # v7x megacore: keep >= 2 batch tiles when B permits so both TCs get work.
    if B >= 16 and pl.cdiv(B, tb) < 2:
        tb = _round_up(pl.cdiv(B, 2), 8)
    tk = min(_round_up(k_tile, 128), _round_up(D, 128))

    nb = pl.cdiv(B, tb)
    nk = pl.cdiv(D, tk)
    k_rem = D % tk

    # Zero-pad only W along K (tiny: <= n_classes*(tk-1) elements).  x is NOT
    # padded/copied; the ragged last K tile is masked in-kernel instead, and
    # out-of-bounds writes of the ragged last batch tile are discarded.
    Dp = nk * tk
    wt = w_avg_t
    if Dp != D:
        wt = jnp.zeros((n_classes, Dp), w_avg_t.dtype).at[:, :D].set(w_avg_t)

    kernel = functools.partial(_ensemble_kernel, n_classes=n_classes, k_rem=k_rem)

    # VMEM budget from actual (lane-padded) tile footprint + headroom; never
    # request the full physical VMEM (v7x has only 64 MiB per TensorCore).
    x_bytes = jnp.dtype(x2d.dtype).itemsize
    w_bytes = jnp.dtype(wt.dtype).itemsize
    lane_nc = _round_up(n_classes, 128)
    footprint = (2 * tb * tk * x_bytes                          # x double buffer
                 + 2 * _round_up(n_classes, 8) * tk * w_bytes   # W^T double buffer
                 + 2 * 8 * lane_nc * 4                          # bias
                 + tb * lane_nc * 4                             # f32 accumulator
                 + 2 * tb * lane_nc * 4)                        # output double buffer
    vmem_limit = int(min(48 * 1024 * 1024, max(16 * 1024 * 1024, 2 * footprint)))

    out = pl.pallas_call(
        kernel,
        out_shape=jax.ShapeDtypeStruct((B, n_classes), jnp.float32),
        grid_spec=pltpu.PrefetchScalarGridSpec(
            num_scalar_prefetch=0,
            grid=(nb, nk),                                       # K (reduction) last
            in_specs=[
                pl.BlockSpec((tb, tk), lambda i, k: (i, k)),          # x tile
                pl.BlockSpec((n_classes, tk), lambda i, k: (0, k)),   # W^T (lane-dense)
                pl.BlockSpec((1, n_classes), lambda i, k: (0, 0)),    # bias
            ],
            out_specs=pl.BlockSpec((tb, n_classes), lambda i, k: (i, 0)),
            scratch_shapes=[pltpu.VMEM((tb, n_classes), jnp.float32)],
        ),
        compiler_params=pltpu.CompilerParams(
            dimension_semantics=("parallel", "arbitrary"),
            vmem_limit_bytes=vmem_limit),
    )(x2d, wt, b_avg)
    return out


def _reference(x_nchw, weights, biases):
    """Pure-JAX reference for the same forward semantics."""
    B = x_nchw.shape[0]
    x2d = x_nchw.reshape(B, -1).astype(jnp.float32)
    logits = jnp.einsum("bd,mdc->mbc", x2d, weights.astype(jnp.float32)) \
             + biases.astype(jnp.float32)
    avg = jnp.mean(logits, axis=0)
    if avg.shape[1] == 1:
        return jax.nn.sigmoid(avg)
    return jax.nn.softmax(avg, axis=1)


if __name__ == "__main__":
    key = jax.random.PRNGKey(0)

    # --- multi-class case (softmax path), f32 ---
    B, C, H, W = 2, 4, 16, 16
    D = C * H * W
    M = 3            # number of networks in the ensemble
    n_classes = 4

    k1, k2, k3, k4, k5 = jax.random.split(key, 5)
    x = jax.random.normal(k1, (B, C, H, W), dtype=jnp.float32)
    Wk = jax.random.normal(k2, (M, D, n_classes), dtype=jnp.float32) * 0.02
    bk = jax.random.normal(k3, (M, 1, n_classes), dtype=jnp.float32) * 0.1

    out = jax.block_until_ready(averaging_ensemble(x, Wk, bk))
    ref = _reference(x, Wk, bk)
    assert out.shape == (B, n_classes)
    assert jnp.allclose(out, ref, atol=1e-4), "softmax path mismatch"
    assert jnp.allclose(jnp.sum(out, axis=1), 1.0, atol=1e-5)

    # --- binary case (n_classes == 1 -> sigmoid path) ---
    W1 = jax.random.normal(k4, (M, D, 1), dtype=jnp.float32) * 0.02
    b1 = jax.random.normal(k5, (M, 1, 1), dtype=jnp.float32) * 0.1
    out1 = jax.block_until_ready(averaging_ensemble(x, W1, b1))
    ref1 = _reference(x, W1, b1)
    assert out1.shape == (B, 1)
    assert jnp.allclose(out1, ref1, atol=1e-4), "sigmoid path mismatch"

    # --- non-aligned B / D (exercise the ragged-tile mask path, no x copy) ---
    kb1, kb2, kb3 = jax.random.split(k1, 3)
    Bn, Cn, Hn, Wn = 5, 3, 10, 10            # D = 300, not a multiple of 128
    xn = jax.random.normal(kb1, (Bn, Cn, Hn, Wn), dtype=jnp.float32)
    Wn_ = jax.random.normal(kb2, (M, Cn * Hn * Wn, n_classes),
                            dtype=jnp.float32) * 0.02
    bn_ = jax.random.normal(kb3, (M, 1, n_classes), dtype=jnp.float32) * 0.1
    outn = jax.block_until_ready(averaging_ensemble(xn, Wn_, bn_))
    refn = _reference(xn, Wn_, bn_)
    assert outn.shape == (Bn, n_classes)
    assert jnp.allclose(outn, refn, atol=1e-4), "ragged path mismatch"

    # --- bf16 operands straight into the MXU (looser tolerance) ---
    out_bf = jax.block_until_ready(
        averaging_ensemble(x.astype(jnp.bfloat16),
                           Wk.astype(jnp.bfloat16),
                           bk.astype(jnp.bfloat16)))
    assert jnp.allclose(out_bf, ref, atol=3e-2), "bf16 path mismatch"

    print("KERNEL_OK")
</pallas_src>

<mosaic_0001>
module attributes {stable_mosaic.version = 11 : i64} {
  func.func @_ensemble_kernel(%arg0: i32, %arg1: i32, %arg2: memref<8x1024xf32, #tpu.memory_space<vmem>>, %arg3: memref<4x1024xf32, #tpu.memory_space<vmem>>, %arg4: memref<1x4xf32, #tpu.memory_space<vmem>>, %arg5: memref<8x4xf32, #tpu.memory_space<vmem>>, %arg6: memref<8x4xf32, #tpu.memory_space<vmem>>) attributes {dimension_semantics = [#tpu.dimension_semantics<parallel>, #tpu.dimension_semantics<arbitrary>], iteration_bounds = array<i64: 1, 1>, scalar_prefetch = 0 : i64, scratch_operands = 1 : i64, tpu.core_type = #tpu.core_type<tc>, window_params = [{transform_indices = @transform_0, window_bounds = array<i64: 8, 1024>}, {transform_indices = @transform_1, window_bounds = array<i64: 4, 1024>}, {pipeline_mode = #tpu.pipeline_mode<synchronous>, transform_indices = @transform_2, window_bounds = array<i64: 1, 4>}, {transform_indices = @transform_3, window_bounds = array<i64: 8, 4>}]} {
    %c0_i32 = arith.constant 0 : i32
    %0 = arith.cmpi eq, %arg1, %c0_i32 : i32
    %1 = arith.extui %0 : i1 to i32
    %c0_i32_0 = arith.constant 0 : i32
    %2 = arith.cmpi ne, %1, %c0_i32_0 : i32
    scf.if %2 {
      %c0_10 = arith.constant 0 : index
      %c0_11 = arith.constant 0 : index
      %12 = vector.load %arg4[%c0_10, %c0_11] : memref<1x4xf32, #tpu.memory_space<vmem>>, vector<1x4xf32>
      %13 = vector.shape_cast %12 : vector<1x4xf32> to vector<1x4xf32>
      %14 = vector.broadcast %13 : vector<1x4xf32> to vector<8x4xf32>
      %c0_12 = arith.constant 0 : index
      %c0_13 = arith.constant 0 : index
      %15 = vector.load %arg6[%c0_12, %c0_13] : memref<8x4xf32, #tpu.memory_space<vmem>>, vector<8x4xf32>
      tpu.vector_store %arg6[%c0_12, %c0_13], %14 {strides = array<i32>} : memref<8x4xf32, #tpu.memory_space<vmem>>, vector<8x4xf32>,
    } else {
    }
    %c0 = arith.constant 0 : index
    %c0_1 = arith.constant 0 : index
    %3 = vector.load %arg2[%c0, %c0_1] : memref<8x1024xf32, #tpu.memory_space<vmem>>, vector<8x1024xf32>
    %c0_2 = arith.constant 0 : index
    %c0_3 = arith.constant 0 : index
    %4 = vector.load %arg6[%c0_2, %c0_3] : memref<8x4xf32, #tpu.memory_space<vmem>>, vector<8x4xf32>
    %c0_4 = arith.constant 0 : index
    %c0_5 = arith.constant 0 : index
    %5 = vector.load %arg3[%c0_4, %c0_5] : memref<4x1024xf32, #tpu.memory_space<vmem>>, vector<4x1024xf32>
    %cst = arith.constant dense<0.000000e+00> : vector<8x4xf32>
    %6 = tpu.matmul %3, %5, %cst {dimension_numbers = #tpu.dot_dimension_numbers<[1], [1], [0], [0], [0, 0, 1, 0], [], []>} : vector<8x1024xf32>, vector<4x1024xf32>, vector<8x4xf32> -> vector<8x4xf32>
    %7 = arith.addf %4, %6 : vector<8x4xf32>
    %c0_6 = arith.constant 0 : index
    %c0_7 = arith.constant 0 : index
    %8 = vector.load %arg6[%c0_6, %c0_7] : memref<8x4xf32, #tpu.memory_space<vmem>>, vector<8x4xf32>
    tpu.vector_store %arg6[%c0_6, %c0_7], %7 {strides = array<i32>} : memref<8x4xf32, #tpu.memory_space<vmem>>, vector<8x4xf32>,
    %c0_i32_8 = arith.constant 0 : i32
    %9 = arith.cmpi eq, %arg1, %c0_i32_8 : i32
    %10 = arith.extui %9 : i1 to i32
    %c0_i32_9 = arith.constant 0 : i32
    %11 = arith.cmpi ne, %10, %c0_i32_9 : i32
    scf.if %11 {
      %c0_10 = arith.constant 0 : index
      %c0_11 = arith.constant 0 : index
      %12 = vector.load %arg6[%c0_10, %c0_11] : memref<8x4xf32, #tpu.memory_space<vmem>>, vector<8x4xf32>
      %cst_12 = arith.constant dense<0xFF800000> : vector<8xf32>
      %13 = vector.multi_reduction <maximumf>, %12, %cst_12 [1] : vector<8x4xf32> to vector<8xf32>
      %14 = vector.shape_cast %13 : vector<8xf32> to vector<8x1xf32>
      %15 = vector.broadcast %14 : vector<8x1xf32> to vector<8x4xf32>
      %16 = arith.subf %12, %15 : vector<8x4xf32>
      %17 = math.exp %16 : vector<8x4xf32>
      %cst_13 = arith.constant dense<0.000000e+00> : vector<8xf32>
      %18 = vector.multi_reduction <add>, %17, %cst_13 [1] : vector<8x4xf32> to vector<8xf32>
      %19 = vector.shape_cast %18 : vector<8xf32> to vector<8x1xf32>
      %20 = vector.broadcast %19 : vector<8x1xf32> to vector<8x4xf32>
      %21 = arith.divf %17, %20 : vector<8x4xf32>
      %c0_14 = arith.constant 0 : index
      %c0_15 = arith.constant 0 : index
      %22 = vector.load %arg5[%c0_14, %c0_15] : memref<8x4xf32, #tpu.memory_space<vmem>>, vector<8x4xf32>
      tpu.vector_store %arg5[%c0_14, %c0_15], %21 {strides = array<i32>} : memref<8x4xf32, #tpu.memory_space<vmem>>, vector<8x4xf32>,
    } else {
    }
    return
  }
  func.func @transform_0(%arg0: i32, %arg1: i32) -> (i32, i32) {
    %c0_i32 = arith.constant 0 : i32
    return %arg0, %arg1 : i32, i32
  }
  func.func @transform_1(%arg0: i32, %arg1: i32) -> (i32, i32) {
    %c0_i32 = arith.constant 0 : i32
    %c0_i32_0 = arith.constant 0 : i32
    return %c0_i32, %arg1 : i32, i32
  }
  func.func @transform_2(%arg0: i32, %arg1: i32) -> (i32, i32) {
    %c0_i32 = arith.constant 0 : i32
    %c0_i32_0 = arith.constant 0 : i32
    %c0_i32_1 = arith.constant 0 : i32
    return %c0_i32, %c0_i32_0 : i32, i32
  }
  func.func @transform_3(%arg0: i32, %arg1: i32) -> (i32, i32) {
    %c0_i32 = arith.constant 0 : i32
    %c0_i32_0 = arith.constant 0 : i32
    return %arg0, %c0_i32 : i32, i32
  }
}

</mosaic_0001>

<llo_original>
// kernel: tpu_custom_call.1
$region0: #{tpu_custom_call.1}
  #allocation0 [shape = 'u32[]', space=smem, size = 0x4, offset = 0x4, fixed_abs, tag = 'smem constant byte address 0x4 - core index']
  #allocation1 [shape = 'u32[144,128]{1,0:T(1,128)}', space=vmem, size = 0x12000, scoped, tag = 'internal scratch']
  #allocation2 [shape = 'f32[8,4]{1,0:T(8,128)}', space=vmem, size = 0x1000, scoped, tag = 'scratch operand']
  %s0 = inlined_call_operand.hbm [shape: f32[2,1024], index: 0, kind: input, shape index: {}]
  %s1 = inlined_call_operand.hbm [shape: f32[4,1024], index: 1, kind: input, shape index: {}]
  %s2 = inlined_call_operand.vmem [shape: f32[1,4], index: 2, kind: input, shape index: {}]
  %s3 = inlined_call_operand.hbm [shape: f32[2,4], index: 3, kind: output, shape index: {}]
  %s4 = sld [smem:[#allocation0]]
  $region38: #{tpu_custom_call.1} parent=0
    _
  %s6 = ssub.s32 1, %s4
  %s7 = scalar_select 0, %s6, %s4
  $region1: #{tpu_custom_call.1} parent=0
    #allocation3 [shape = 'u8[32768]{0}', space=vmem, size = 0x8000, scoped, tag = 'input window, operand 0, single buffered']
    #allocation4 [shape = 's32[1]{0}', space=sflag, size = 0x4, scoped, tag = 'scoped memory for tpu_custom_call.1']
    #allocation5 [shape = 's32[1]{0}', space=sflag, size = 0x4, scoped, tag = 'scoped memory for tpu_custom_call.1']
    #allocation6 [shape = 'u8[16384]{0}', space=vmem, size = 0x4000, scoped, tag = 'input window, operand 1, single buffered']
    #allocation7 [shape = 's32[1]{0}', space=sflag, size = 0x4, scoped, tag = 'scoped memory for tpu_custom_call.1']
    #allocation8 [shape = 'u8[4096]{0}', space=vmem, size = 0x1000, scoped, tag = 'output window, operand 0, single buffered']
    %8 = vsyncpa [#allocation4], 0
    %9 = vsyncpa [#allocation7], 0
    %10 = vsyncpa [#allocation5], 0
    // Predicated region
    $region2: #{tpu_custom_call.1} parent=1 // pred_check
      _
    $region3: #{tpu_custom_call.1} parent=1 // pred_check_branch
      %12 = sbr.rel (0) target = $region5
    $region4: #{tpu_custom_call.1} parent=1 // pred_region
      %s14 = ssub.s32 1024, 256
      %15 = vsyncadd [#allocation4], %s14
      %s16 = sshll.u32 [#allocation3], 4
      %s17 = int_to_ptr.vmem [resolvable:$true] %s16
      %22 = dma.hbm_to_vmem [thread:$0]  %s0, 256, %s17, [#allocation4], 256, 256, 16
    $region5: #{tpu_custom_call.1} parent=1 // pred_fallthru
      _
    // Predicated region
    $region6: #{tpu_custom_call.1} parent=1 // pred_check
      _
    $region7: #{tpu_custom_call.1} parent=1 // pred_check_branch
      %24 = sbr.rel (0) target = $region9
    $region8: #{tpu_custom_call.1} parent=1 // pred_region
      %s26 = ssub.s32 512, 512
      %27 = vsyncadd [#allocation7], %s26
      %s29 = sshll.u32 [#allocation6], 4
      %s30 = int_to_ptr.vmem [resolvable:$true] %s29
      %32 = dma.hbm_to_vmem [thread:$0]  %s1, 512, %s30, [#allocation7]
    $region9: #{tpu_custom_call.1} parent=1 // pred_fallthru
      _
    // Predicated region
    $region10: #{tpu_custom_call.1} parent=1 // pred_check
      _
    $region11: #{tpu_custom_call.1} parent=1 // pred_check_branch
      %34 = sbr.rel (0) target = $region13
    $region12: #{tpu_custom_call.1} parent=1 // pred_region
      _
    $region13: #{tpu_custom_call.1} parent=1 // pred_fallthru
      _
    // Predicated region
    $region14: #{tpu_custom_call.1} parent=1 // pred_check
      _
    $region15: #{tpu_custom_call.1} parent=1 // pred_check_branch
      %36 = sbr.rel (0) target = $region17
    $region16: #{tpu_custom_call.1} parent=1 // pred_region
      %37 = dma.done [#allocation4], 1024
    $region17: #{tpu_custom_call.1} parent=1 // pred_fallthru
      _
    // Predicated region
    $region18: #{tpu_custom_call.1} parent=1 // pred_check
      _
    $region19: #{tpu_custom_call.1} parent=1 // pred_check_branch
      %39 = sbr.rel (0) target = $region21
    $region20: #{tpu_custom_call.1} parent=1 // pred_region
      %40 = dma.done [#allocation7], 512
    $region21: #{tpu_custom_call.1} parent=1 // pred_fallthru
      _
    %p41 = scmp.eq.s32.totalorder 0, 0
    // Predicated region
    $region22: #{tpu_custom_call.1} parent=1 // pred_check
      %p42 = pneg %p41
    $region23: #{tpu_custom_call.1} parent=1 // pred_check_branch
      %44 = sbr.rel (%p42) target = $region25
    $region24: #{tpu_custom_call.1} parent=1 // pred_region
      %v45 = vld [vmem:[%s2] sm:$0x1]
      %v47 = vlaneseq
      %v48 = vshrl.u32 %v47, 7
      %v49 = vsub.s32 0, %v48
      %v50 = vrot.slane %v45, %v49
      %vm52 = vcmask 31744
      %53 = vst.msk [vmem:[#allocation2] sm:$0xff] %vm52, %v50
    $region25: #{tpu_custom_call.1} parent=1 // pred_fallthru
      _
    %v54 = vld [vmem:[#allocation3] sm:$0xff]
    %v55 = vld [vmem:[#allocation3 + $0x8] sm:$0xff]
    %v56 = vld [vmem:[#allocation3 + $0x10] sm:$0xff]
    %v57 = vld [vmem:[#allocation3 + $0x18] sm:$0xff]
    %v58 = vld [vmem:[#allocation3 + $0x20] sm:$0xff]
    %v59 = vld [vmem:[#allocation3 + $0x28] sm:$0xff]
    %v60 = vld [vmem:[#allocation3 + $0x30] sm:$0xff]
    %v61 = vld [vmem:[#allocation3 + $0x38] sm:$0xff]
    %v62 = vld [vmem:[#allocation2] sm:$0xff]
    %v63 = vld [vmem:[#allocation6] sm:$0xff]
    %v64 = vld [vmem:[#allocation6 + $0x8] sm:$0xff]
    %v65 = vld [vmem:[#allocation6 + $0x10] sm:$0xff]
    %v66 = vld [vmem:[#allocation6 + $0x18] sm:$0xff]
    %v75 = vcombine.low %v54, %v56
    %v76 = vcombine.high %v54, %v56
    %v77 = vcombine.low %v58, %v60
    %v78 = vcombine.high %v58, %v60
    %v80 = vunpack.c.l.s4 1983009808
    %v81 = vunpack.c.0.s8 %v80
    %v82 = vlaneseq
    %v83 = vshrl.u32 %v82, 7
    %v84 = vsub.s32 %v81, %v83
    %v85 = vrot.slane %v75, %v84
    %v87 = vunpack.c.l.s4 1983009808
    %v88 = vunpack.c.0.s8 %v87
    %v89 = vlaneseq
    %v90 = vshrl.u32 %v89, 7
    %v91 = vsub.s32 %v88, %v90
    %v92 = vrot.slane %v76, %v91
    %v94 = vunpack.c.l.s4 1983009808
    %v95 = vunpack.c.0.s8 %v94
    %v96 = vlaneseq
    %v97 = vshrl.u32 %v96, 7
    %v98 = vsub.s32 %v95, %v97
    %v99 = vrot.slane %v77, %v98
    %v101 = vunpack.c.l.s4 1983009808
    %v102 = vunpack.c.0.s8 %v101
    %v103 = vlaneseq
    %v104 = vshrl.u32 %v103, 7
    %v105 = vsub.s32 %v102, %v104
    %v106 = vrot.slane %v78, %v105
    %v107 = vcombine.low %v85, %v99
    %v108 = vcombine.high %v85, %v99
    %v109 = vcombine.low %v92, %v106
    %v110 = vcombine.high %v92, %v106
    %v111 = vcombine.low %v55, %v57
    %v112 = vcombine.high %v55, %v57
    %v113 = vcombine.low %v59, %v61
    %v114 = vcombine.high %v59, %v61
    %v116 = vunpack.c.l.s4 1983009808
    %v117 = vunpack.c.0.s8 %v116
    %v118 = vlaneseq
    %v119 = vshrl.u32 %v118, 7
    %v120 = vsub.s32 %v117, %v119
    %v121 = vrot.slane %v111, %v120
    %v123 = vunpack.c.l.s4 1983009808
    %v124 = vunpack.c.0.s8 %v123
    %v125 = vlaneseq
    %v126 = vshrl.u32 %v125, 7
    %v127 = vsub.s32 %v124, %v126
    %v128 = vrot.slane %v112, %v127
    %v130 = vunpack.c.l.s4 1983009808
    %v131 = vunpack.c.0.s8 %v130
    %v132 = vlaneseq
    %v133 = vshrl.u32 %v132, 7
    %v134 = vsub.s32 %v131, %v133
    %v135 = vrot.slane %v113, %v134
    %v137 = vunpack.c.l.s4 1983009808
    %v138 = vunpack.c.0.s8 %v137
    %v139 = vlaneseq
    %v140 = vshrl.u32 %v139, 7
    %v141 = vsub.s32 %v138, %v140
    %v142 = vrot.slane %v114, %v141
    %v143 = vcombine.low %v121, %v135
    %v144 = vcombine.high %v121, %v135
    %v145 = vcombine.low %v128, %v142
    %v146 = vcombine.high %v128, %v142
    %v159 = vcombine.high %v63, %v63
    %v160 = vcombine.high %v64, %v64
    %v161 = vcombine.high %v65, %v65
    %v162 = vcombine.high %v66, %v66
    %167 = vmatprep.subr.mxu0 %v159
    %168 = vmatpush1.xpose.msra.mxu0 %v63
    %169 = vmatprep.subr.mxu0 0.0
    %170 = vmatpush1.xpose.msra.mxu0 0.0
    %171 = vmatprep.subr.mxu0 0.0
    %172 = vmatpush1.xpose.msra.mxu0 0.0
    %173 = vmatprep.subr.mxu0 0.0
    %174 = vmatpush1.xpose.msra.mxu0 0.0
    %175 = vmatprep.subr.mxu0 0.0
    %176 = vmatpush1.xpose.msra.mxu0 0.0
    %177 = vmatprep.subr.mxu0 0.0
    %178 = vmatpush1.xpose.msra.mxu0 0.0
    %179 = vmatprep.subr.mxu0 0.0
    %180 = vmatpush1.xpose.msra.mxu0 0.0
    %181 = vmatprep.subr.mxu0 0.0
    %182 = vmatpush1.xpose.msra.mxu0 0.0
    %183 = vmatprep.subr.mxu0 0.0
    %184 = vmatpush1.xpose.msra.mxu0 0.0
    %185 = vmatprep.subr.mxu0 0.0
    %186 = vmatpush1.xpose.msra.mxu0 0.0
    %187 = vmatprep.subr.mxu0 0.0
    %188 = vmatpush1.xpose.msra.mxu0 0.0
    %189 = vmatprep.subr.mxu0 0.0
    %190 = vmatpush1.xpose.msra.mxu0 0.0
    %191 = vmatprep.subr.mxu0 0.0
    %192 = vmatpush1.xpose.msra.mxu0 0.0
    %193 = vmatprep.subr.mxu0 0.0
    %194 = vmatpush1.xpose.msra.mxu0 0.0
    %195 = vmatprep.subr.mxu0 0.0
    %196 = vmatpush1.xpose.msra.mxu0 0.0
    %197 = vmatprep.subr.mxu0 0.0
    %198 = vmatpush1.xpose.msra.mxu0 0.0
    %199 = vmatprep.subr.mxu0 0.0
    %200 = vmatpush1.xpose.msra.mxu0 0.0
    %201 = vmatprep.subr.mxu0 0.0
    %202 = vmatpush1.xpose.msra.mxu0 0.0
    %203 = vmatprep.subr.mxu0 0.0
    %204 = vmatpush1.xpose.msra.mxu0 0.0
    %205 = vmatprep.subr.mxu0 0.0
    %206 = vmatpush1.xpose.msra.mxu0 0.0
    %207 = vmatprep.subr.mxu0 0.0
    %208 = vmatpush1.xpose.msra.mxu0 0.0
    %209 = vmatprep.subr.mxu0 0.0
    %210 = vmatpush1.xpose.msra.mxu0 0.0
    %211 = vmatprep.subr.mxu0 0.0
    %212 = vmatpush1.xpose.msra.mxu0 0.0
    %213 = vmatprep.subr.mxu0 0.0
    %214 = vmatpush1.xpose.msra.mxu0 0.0
    %215 = vmatprep.subr.mxu0 0.0
    %216 = vmatpush1.xpose.msra.mxu0 0.0
    %217 = vmatprep.subr.mxu0 0.0
    %218 = vmatpush1.xpose.msra.mxu0 0.0
    %219 = vmatprep.subr.mxu0 0.0
    %220 = vmatpush1.xpose.msra.mxu0 0.0
    %221 = vmatprep.subr.mxu0 0.0
    %222 = vmatpush1.xpose.msra.mxu0 0.0
    %223 = vmatprep.subr.mxu0 0.0
    %224 = vmatpush1.xpose.msra.mxu0 0.0
    %225 = vmatprep.subr.mxu0 0.0
    %226 = vmatpush1.xpose.msra.mxu0 0.0
    %227 = vmatprep.subr.mxu0 0.0
    %228 = vmatpush1.xpose.msra.mxu0 0.0
    %229 = vmatprep.subr.mxu0 0.0
    %230 = vmatpush1.xpose.msra.mxu0 0.0
    %231 = vmatprep.mubr.f32.mxu0 %v108
    %232 = vmatmul.mubr.f32.gmra.mrb[0].mxu0 %v107
    %v233 = vpop.f32.mrb[0].mxu0
    %v234 = vadd.f32 0.0, %v233
    %v235 = vpop.f32.mrb[0].mxu0
    %236 = vdwg.mxu0
    %237 = vmatprep.subr.mxu0 %v160
    %238 = vmatpush1.xpose.msra.mxu0 %v64
    %239 = vmatprep.subr.mxu0 0.0
    %240 = vmatpush1.xpose.msra.mxu0 0.0
    %241 = vmatprep.subr.mxu0 0.0
    %242 = vmatpush1.xpose.msra.mxu0 0.0
    %243 = vmatprep.subr.mxu0 0.0
    %244 = vmatpush1.xpose.msra.mxu0 0.0
    %245 = vmatprep.subr.mxu0 0.0
    %246 = vmatpush1.xpose.msra.mxu0 0.0
    %247 = vmatprep.subr.mxu0 0.0
    %248 = vmatpush1.xpose.msra.mxu0 0.0
    %249 = vmatprep.subr.mxu0 0.0
    %250 = vmatpush1.xpose.msra.mxu0 0.0
    %251 = vmatprep.subr.mxu0 0.0
    %252 = vmatpush1.xpose.msra.mxu0 0.0
    %253 = vmatprep.subr.mxu0 0.0
    %254 = vmatpush1.xpose.msra.mxu0 0.0
    %255 = vmatprep.subr.mxu0 0.0
    %256 = vmatpush1.xpose.msra.mxu0 0.0
    %257 = vmatprep.subr.mxu0 0.0
    %258 = vmatpush1.xpose.msra.mxu0 0.0
    %259 = vmatprep.subr.mxu0 0.0
    %260 = vmatpush1.xpose.msra.mxu0 0.0
    %261 = vmatprep.subr.mxu0 0.0
    %262 = vmatpush1.xpose.msra.mxu0 0.0
    %263 = vmatprep.subr.mxu0 0.0
    %264 = vmatpush1.xpose.msra.mxu0 0.0
    %265 = vmatprep.subr.mxu0 0.0
    %266 = vmatpush1.xpose.msra.mxu0 0.0
    %267 = vmatprep.subr.mxu0 0.0
    %268 = vmatpush1.xpose.msra.mxu0 0.0
    %269 = vmatprep.subr.mxu0 0.0
    %270 = vmatpush1.xpose.msra.mxu0 0.0
    %271 = vmatprep.subr.mxu0 0.0
    %272 = vmatpush1.xpose.msra.mxu0 0.0
    %273 = vmatprep.subr.mxu0 0.0
    %274 = vmatpush1.xpose.msra.mxu0 0.0
    %275 = vmatprep.subr.mxu0 0.0
    %276 = vmatpush1.xpose.msra.mxu0 0.0
    %277 = vmatprep.subr.mxu0 0.0
    %278 = vmatpush1.xpose.msra.mxu0 0.0
    %279 = vmatprep.subr.mxu0 0.0
    %280 = vmatpush1.xpose.msra.mxu0 0.0
    %281 = vmatprep.subr.mxu0 0.0
    %282 = vmatpush1.xpose.msra.mxu0 0.0
    %283 = vmatprep.subr.mxu0 0.0
    %284 = vmatpush1.xpose.msra.mxu0 0.0
    %285 = vmatprep.subr.mxu0 0.0
    %286 = vmatpush1.xpose.msra.mxu0 0.0
    %287 = vmatprep.subr.mxu0 0.0
    %288 = vmatpush1.xpose.msra.mxu0 0.0
    %289 = vmatprep.subr.mxu0 0.0
    %290 = vmatpush1.xpose.msra.mxu0 0.0
    %291 = vmatprep.subr.mxu0 0.0
    %292 = vmatpush1.xpose.msra.mxu0 0.0
    %293 = vmatprep.subr.mxu0 0.0
    %294 = vmatpush1.xpose.msra.mxu0 0.0
    %295 = vmatprep.subr.mxu0 0.0
    %296 = vmatpush1.xpose.msra.mxu0 0.0
    %297 = vmatprep.subr.mxu0 0.0
    %298 = vmatpush1.xpose.msra.mxu0 0.0
    %299 = vmatprep.subr.mxu0 0.0
    %300 = vmatpush1.xpose.msra.mxu0 0.0
    %301 = vmatprep.mubr.f32.mxu0 %v110
    %302 = vmatmul.mubr.f32.gmra.mrb[0].mxu0 %v109
    %v303 = vpop.f32.mrb[0].mxu0
    %v304 = vadd.f32 %v234, %v303
    %v305 = vpop.f32.mrb[0].mxu0
    %306 = vdwg.mxu0
    %307 = vmatprep.subr.mxu0 %v161
    %308 = vmatpush1.xpose.msra.mxu0 %v65
    %309 = vmatprep.subr.mxu0 0.0
    %310 = vmatpush1.xpose.msra.mxu0 0.0
    %311 = vmatprep.subr.mxu0 0.0
    %312 = vmatpush1.xpose.msra.mxu0 0.0
    %313 = vmatprep.subr.mxu0 0.0
    %314 = vmatpush1.xpose.msra.mxu0 0.0
    %315 = vmatprep.subr.mxu0 0.0
    %316 = vmatpush1.xpose.msra.mxu0 0.0
    %317 = vmatprep.subr.mxu0 0.0
    %318 = vmatpush1.xpose.msra.mxu0 0.0
    %319 = vmatprep.subr.mxu0 0.0
    %320 = vmatpush1.xpose.msra.mxu0 0.0
    %321 = vmatprep.subr.mxu0 0.0
    %322 = vmatpush1.xpose.msra.mxu0 0.0
    %323 = vmatprep.subr.mxu0 0.0
    %324 = vmatpush1.xpose.msra.mxu0 0.0
    %325 = vmatprep.subr.mxu0 0.0
    %326 = vmatpush1.xpose.msra.mxu0 0.0
    %327 = vmatprep.subr.mxu0 0.0
    %328 = vmatpush1.xpose.msra.mxu0 0.0
    %329 = vmatprep.subr.mxu0 0.0
    %330 = vmatpush1.xpose.msra.mxu0 0.0
    %331 = vmatprep.subr.mxu0 0.0
    %332 = vmatpush1.xpose.msra.mxu0 0.0
    %333 = vmatprep.subr.mxu0 0.0
    %334 = vmatpush1.xpose.msra.mxu0 0.0
    %335 = vmatprep.subr.mxu0 0.0
    %336 = vmatpush1.xpose.msra.mxu0 0.0
    %337 = vmatprep.subr.mxu0 0.0
    %338 = vmatpush1.xpose.msra.mxu0 0.0
    %339 = vmatprep.subr.mxu0 0.0
    %340 = vmatpush1.xpose.msra.mxu0 0.0
    %341 = vmatprep.subr.mxu0 0.0
    %342 = vmatpush1.xpose.msra.mxu0 0.0
    %343 = vmatprep.subr.mxu0 0.0
    %344 = vmatpush1.xpose.msra.mxu0 0.0
    %345 = vmatprep.subr.mxu0 0.0
    %346 = vmatpush1.xpose.msra.mxu0 0.0
    %347 = vmatprep.subr.mxu0 0.0
    %348 = vmatpush1.xpose.msra.mxu0 0.0
    %349 = vmatprep.subr.mxu0 0.0
    %350 = vmatpush1.xpose.msra.mxu0 0.0
    %351 = vmatprep.subr.mxu0 0.0
    %352 = vmatpush1.xpose.msra.mxu0 0.0
    %353 = vmatprep.subr.mxu0 0.0
    %354 = vmatpush1.xpose.msra.mxu0 0.0
    %355 = vmatprep.subr.mxu0 0.0
    %356 = vmatpush1.xpose.msra.mxu0 0.0
    %357 = vmatprep.subr.mxu0 0.0
    %358 = vmatpush1.xpose.msra.mxu0 0.0
    %359 = vmatprep.subr.mxu0 0.0
    %360 = vmatpush1.xpose.msra.mxu0 0.0
    %361 = vmatprep.subr.mxu0 0.0
    %362 = vmatpush1.xpose.msra.mxu0 0.0
    %363 = vmatprep.subr.mxu0 0.0
    %364 = vmatpush1.xpose.msra.mxu0 0.0
    %365 = vmatprep.subr.mxu0 0.0
    %366 = vmatpush1.xpose.msra.mxu0 0.0
    %367 = vmatprep.subr.mxu0 0.0
    %368 = vmatpush1.xpose.msra.mxu0 0.0
    %369 = vmatprep.subr.mxu0 0.0
    %370 = vmatpush1.xpose.msra.mxu0 0.0
    %371 = vmatprep.mubr.f32.mxu0 %v144
    %372 = vmatmul.mubr.f32.gmra.mrb[0].mxu0 %v143
    %v373 = vpop.f32.mrb[0].mxu0
    %v374 = vadd.f32 %v304, %v373
    %v375 = vpop.f32.mrb[0].mxu0
    %376 = vdwg.mxu0
    %377 = vmatprep.subr.mxu0 %v162
    %378 = vmatpush1.xpose.msra.mxu0 %v66
    %379 = vmatprep.subr.mxu0 0.0
    %380 = vmatpush1.xpose.msra.mxu0 0.0
    %381 = vmatprep.subr.mxu0 0.0
    %382 = vmatpush1.xpose.msra.mxu0 0.0
    %383 = vmatprep.subr.mxu0 0.0
    %384 = vmatpush1.xpose.msra.mxu0 0.0
    %385 = vmatprep.subr.mxu0 0.0
    %386 = vmatpush1.xpose.msra.mxu0 0.0
    %387 = vmatprep.subr.mxu0 0.0
    %388 = vmatpush1.xpose.msra.mxu0 0.0
    %389 = vmatprep.subr.mxu0 0.0
    %390 = vmatpush1.xpose.msra.mxu0 0.0
    %391 = vmatprep.subr.mxu0 0.0
    %392 = vmatpush1.xpose.msra.mxu0 0.0
    %393 = vmatprep.subr.mxu0 0.0
    %394 = vmatpush1.xpose.msra.mxu0 0.0
    %395 = vmatprep.subr.mxu0 0.0
    %396 = vmatpush1.xpose.msra.mxu0 0.0
    %397 = vmatprep.subr.mxu0 0.0
    %398 = vmatpush1.xpose.msra.mxu0 0.0
    %399 = vmatprep.subr.mxu0 0.0
    %400 = vmatpush1.xpose.msra.mxu0 0.0
    %401 = vmatprep.subr.mxu0 0.0
    %402 = vmatpush1.xpose.msra.mxu0 0.0
    %403 = vmatprep.subr.mxu0 0.0
    %404 = vmatpush1.xpose.msra.mxu0 0.0
    %405 = vmatprep.subr.mxu0 0.0
    %406 = vmatpush1.xpose.msra.mxu0 0.0
    %407 = vmatprep.subr.mxu0 0.0
    %408 = vmatpush1.xpose.msra.mxu0 0.0
    %409 = vmatprep.subr.mxu0 0.0
    %410 = vmatpush1.xpose.msra.mxu0 0.0
    %411 = vmatprep.subr.mxu0 0.0
    %412 = vmatpush1.xpose.msra.mxu0 0.0
    %413 = vmatprep.subr.mxu0 0.0
    %414 = vmatpush1.xpose.msra.mxu0 0.0
    %415 = vmatprep.subr.mxu0 0.0
    %416 = vmatpush1.xpose.msra.mxu0 0.0
    %417 = vmatprep.subr.mxu0 0.0
    %418 = vmatpush1.xpose.msra.mxu0 0.0
    %419 = vmatprep.subr.mxu0 0.0
    %420 = vmatpush1.xpose.msra.mxu0 0.0
    %421 = vmatprep.subr.mxu0 0.0
    %422 = vmatpush1.xpose.msra.mxu0 0.0
    %423 = vmatprep.subr.mxu0 0.0
    %424 = vmatpush1.xpose.msra.mxu0 0.0
    %425 = vmatprep.subr.mxu0 0.0
    %426 = vmatpush1.xpose.msra.mxu0 0.0
    %427 = vmatprep.subr.mxu0 0.0
    %428 = vmatpush1.xpose.msra.mxu0 0.0
    %429 = vmatprep.subr.mxu0 0.0
    %430 = vmatpush1.xpose.msra.mxu0 0.0
    %431 = vmatprep.subr.mxu0 0.0
    %432 = vmatpush1.xpose.msra.mxu0 0.0
    %433 = vmatprep.subr.mxu0 0.0
    %434 = vmatpush1.xpose.msra.mxu0 0.0
    %435 = vmatprep.subr.mxu0 0.0
    %436 = vmatpush1.xpose.msra.mxu0 0.0
    %437 = vmatprep.subr.mxu0 0.0
    %438 = vmatpush1.xpose.msra.mxu0 0.0
    %439 = vmatprep.subr.mxu0 0.0
    %440 = vmatpush1.xpose.msra.mxu0 0.0
    %441 = vmatprep.mubr.f32.mxu0 %v146
    %442 = vmatmul.mubr.f32.gmra.mrb[0].mxu0 %v145
    %v443 = vpop.f32.mrb[0].mxu0
    %v444 = vadd.f32 %v374, %v443
    %v445 = vpop.f32.mrb[0].mxu0
    %446 = vdwg.mxu0
    %v447 = vadd.f32 %v62, %v444
    %vm448 = vcmask 31744
    %449 = vst.msk [vmem:[#allocation2] sm:$0xff] %vm448, %v447
    // Predicated region
    $region26: #{tpu_custom_call.1} parent=1 // pred_check
      %p450 = pneg %p41
    $region27: #{tpu_custom_call.1} parent=1 // pred_check_branch
      %452 = sbr.rel (%p450) target = $region29
    $region28: #{tpu_custom_call.1} parent=1 // pred_region
      %v453 = vld [vmem:[#allocation2] sm:$0xff]
      %v454 = vsel %vm448, %v453, -inf
      %455 = vmax.xlane.f32.xlu0 %v454
      %v456 = vpop.xlane.xlu0 %455
      %v457 = vsub.f32 %v453, %v456
      %v458 = vmul.f32 %v457, 1.442695
      %v459 = vpow.pop %v458
      %v460 = vsel %vm448, %v459, 0.0
      %461 = vadd.xlane.f32.xlu0 %v460
      %v462 = vpop.xlane.xlu0 %461
      %v463 = vrcp.pop %v462
      %v464 = vmul.f32 %v459, %v463
      %465 = vst.msk [vmem:[#allocation8] sm:$0xff] %vm448, %v464
    $region29: #{tpu_custom_call.1} parent=1 // pred_fallthru
      _
    // Predicated region
    $region30: #{tpu_custom_call.1} parent=1 // pred_check
      _
    $region31: #{tpu_custom_call.1} parent=1 // pred_check_branch
      %467 = sbr.rel (0) target = $region33
    $region32: #{tpu_custom_call.1} parent=1 // pred_region
      %s469 = ssub.s32 128, 32
      %470 = vsyncadd [#allocation5], %s469
      %s471 = sshll.u32 [#allocation8], 4
      %s472 = int_to_ptr.vmem [resolvable:$true] %s471
      %477 = dma.vmem_to_hbm [thread:$0]  %s472, 32, %s3, [#allocation5], 32, 32, 2
    $region33: #{tpu_custom_call.1} parent=1 // pred_fallthru
      _
    // Predicated region
    $region34: #{tpu_custom_call.1} parent=1 // pred_check
      _
    $region35: #{tpu_custom_call.1} parent=1 // pred_check_branch
      %479 = sbr.rel (0) target = $region37
    $region36: #{tpu_custom_call.1} parent=1 // pred_region
      %480 = dma.done [#allocation5], 128
    $region37: #{tpu_custom_call.1} parent=1 // pred_fallthru
      _
    %481 = vsyncpa [#allocation4], 1
    %482 = vsyncpa [#allocation7], 1
    %483 = vsyncpa [#allocation5], 1

</llo_original>
